<compile_context>
chip_gen: v5e
topology: v5e:2x2
jax: 0.10.0
libtpu: 0.0.40
codegen_flags: <defaults>
</compile_context>

<pallas_src>
import functools

import numpy as np
import jax
import jax.numpy as jnp
from jax.experimental import pallas as pl
from jax.experimental.pallas import tpu as pltpu


def _round_up(x, m):
    return ((x + m - 1) // m) * m


# ----------------------------------------------------------------------------
# Fused Pallas kernel: chained (W @ h + b) [+ ReLU] for all layers.
# refs = (x_ref, w0, b0, w1, b1, ..., o_ref); weights/biases are VMEM-resident
# (constant index_map, single-buffered).  x/o blocks are (nb, C, TILE_L).
# ----------------------------------------------------------------------------
def _fused_stack_kernel(*refs, num_layers, relu, nb):
    x_ref = refs[0]
    o_ref = refs[-1]
    wb = refs[1:-1]

    for b in range(nb):                                  # nb is static, unrolled
        h = x_ref[b]                                     # (C_in, TILE_L)
        for layer in range(num_layers):
            w = wb[2 * layer][...]                       # (C_out, C_in) bf16
            bias = wb[2 * layer + 1][...]                # (C_out, 1) f32
            # bf16 x bf16 on the MXU, f32 accumulation; bias/ReLU in f32.
            h = jnp.dot(w, h.astype(jnp.bfloat16),
                        preferred_element_type=jnp.float32) + bias
            if relu:
                h = jnp.maximum(h, 0.0)
        o_ref[b] = h.astype(o_ref.dtype)


# ----------------------------------------------------------------------------
# Parameter setup (deterministic, synthetic) + BN folding (done once, outside).
# ----------------------------------------------------------------------------
def init_crossover_params(key, channel_in, mlps, bn=True):
    params = []
    in_ch = channel_in
    for out_ch in mlps:
        k_w, k_b, k_g, k_be, k_m, k_v, key = jax.random.split(key, 7)
        layer = {
            # Conv1d(in_ch, out_ch, 1): weight (out_ch, in_ch), bias (out_ch,)
            "conv_w": 0.1 * jax.random.normal(k_w, (out_ch, in_ch), jnp.float32),
            "conv_b": 0.1 * jax.random.normal(k_b, (out_ch,), jnp.float32),
        }
        if bn:
            layer.update({
                "bn_gamma": 1.0 + 0.05 * jax.random.normal(k_g, (out_ch,), jnp.float32),
                "bn_beta": 0.05 * jax.random.normal(k_be, (out_ch,), jnp.float32),
                "bn_mean": 0.05 * jax.random.normal(k_m, (out_ch,), jnp.float32),
                "bn_var": jnp.abs(1.0 + 0.05 * jax.random.normal(k_v, (out_ch,), jnp.float32)),
            })
        params.append(layer)
        in_ch = out_ch
    return params


def fold_layer(layer, bn=True, eps=1e-5):
    """Fold Conv1d(k=1) + BatchNorm1d(eval) into (W_eff, b_eff).

    y = gamma * ((W x + b) - mean) / sqrt(var+eps) + beta
      = (scale * W) x + (scale * (b - mean) + beta)
    """
    W = layer["conv_w"]
    b = layer["conv_b"]
    if bn:
        scale = layer["bn_gamma"] / jnp.sqrt(layer["bn_var"] + eps)
        W_eff = W * scale[:, None]
        b_eff = scale * (b - layer["bn_mean"]) + layer["bn_beta"]
    else:
        W_eff, b_eff = W, b
    return W_eff, b_eff


def fold_params(params, bn=True, eps=1e-5):
    return [fold_layer(l, bn=bn, eps=eps) for l in params]


# ----------------------------------------------------------------------------
# CrossOverBlock forward: single fused pallas_call, tiled over (N, L).
# ----------------------------------------------------------------------------
@functools.partial(jax.jit, static_argnames=("relu", "tile_l", "out_dtype"))
def crossover_block_forward(x_ncl, folded, *, relu=True, tile_l=1024,
                            out_dtype=jnp.bfloat16):
    """x_ncl: (N, C_in, L) (PyTorch Conv1d layout).
    folded: list of (W_eff(Cout,Cin), b_eff(Cout,)) per layer.
    Returns (N, C_last, L) in out_dtype."""
    N, C_in, L = x_ncl.shape
    num_layers = len(folded)
    C_out = int(folded[-1][0].shape[0])

    # Lane tile choice: full L when small (block dim == array dim is always
    # legal), otherwise a multiple of 256 (v6e/v7x MXU width); ragged last
    # L-tile handled by Pallas partial-block masking -> no wrapper pad/slice.
    tl_max = max(256, (tile_l // 256) * 256)
    tl = L if L <= tl_max else tl_max
    num_l = pl.cdiv(L, tl)

    # With a tiny grid the pipeline cannot hide DMA / per-step overhead:
    # merge batch rows into one block per step.
    nb = N if (N * num_l) < 8 else 1
    grid = (N // nb, num_l)

    in_specs = [
        pl.BlockSpec((nb, C_in, tl), lambda n, i: (n, 0, i)),
    ]
    wb_inputs = []
    for (W, b) in folded:
        co, ci = int(W.shape[0]), int(W.shape[1])
        # Full-block, constant index_map, single-buffered -> resident in VMEM
        # across the whole grid with no wasted second buffer.
        in_specs.append(pl.BlockSpec((co, ci), lambda n, i: (0, 0),
                                     pipeline_mode=pl.Buffered(1)))
        in_specs.append(pl.BlockSpec((co, 1), lambda n, i: (0, 0),
                                     pipeline_mode=pl.Buffered(1)))
        wb_inputs.append(W.astype(jnp.bfloat16))           # bf16 MXU weights
        wb_inputs.append(b.astype(jnp.float32).reshape(co, 1))  # f32 bias

    out_spec = pl.BlockSpec((nb, C_out, tl), lambda n, i: (n, 0, i))

    # Explicit VMEM budget: resident params (single buffer) + double-buffered
    # x/out blocks + f32 intermediates, with headroom; capped for v7x (64 MiB).
    in_isz = np.dtype(x_ncl.dtype).itemsize
    out_isz = np.dtype(out_dtype).itemsize
    w_bytes = sum(int(W.shape[0]) * int(W.shape[1]) * 2 + int(W.shape[0]) * 4
                  for W, _ in folded)
    max_c = max([C_in] + [int(W.shape[0]) for W, _ in folded])
    io_block_bytes = 2 * nb * tl * (C_in * in_isz + C_out * out_isz)
    scratch_bytes = 2 * nb * tl * max_c * 4
    vmem_limit = int(1.5 * (w_bytes + io_block_bytes + scratch_bytes)) + (8 << 20)
    vmem_limit = int(min(max(vmem_limit, 24 << 20), 64 << 20))

    kernel = functools.partial(_fused_stack_kernel, num_layers=num_layers,
                               relu=relu, nb=nb)

    out = pl.pallas_call(
        kernel,
        out_shape=jax.ShapeDtypeStruct((N, C_out, L), out_dtype),
        grid=grid,
        in_specs=in_specs,
        out_specs=out_spec,
        compiler_params=pltpu.CompilerParams(
            dimension_semantics=("parallel", "parallel"),
            vmem_limit_bytes=vmem_limit),
    )(x_ncl, *wb_inputs)
    return out


# Pure-JAX reference (no Pallas, f32) for correctness checking.
def crossover_block_reference(x_ncl, folded, *, relu=True):
    h = x_ncl.astype(jnp.float32)
    for W, b in folded:
        h = jnp.einsum("oc,ncl->nol", W, h) + b[None, :, None]
        if relu:
            h = jnp.maximum(h, 0.0)
    return h


if __name__ == "__main__":
    key = jax.random.PRNGKey(0)
    k_x, k_p = jax.random.split(key)

    # Small shapes consistent with the module: batch=2, channel_in=4, L=16,
    # mlps=[8, 16].
    N, C_in, L = 2, 4, 16
    mlps = [8, 16]

    x = jax.random.normal(k_x, (N, C_in, L), jnp.float32)
    params = init_crossover_params(k_p, C_in, mlps, bn=True)

    # Fold BN into conv once (hoisted out of the forward pass).
    folded = fold_params(params, bn=True)

    out = crossover_block_forward(x, folded, relu=True)
    out = jax.block_until_ready(out)

    ref = crossover_block_reference(x, folded, relu=True)
    assert out.shape == (N, mlps[-1], L), out.shape
    # bf16 datapath/output -> loosened tolerance vs f32 reference.
    assert jnp.allclose(out.astype(jnp.float32), ref, atol=3e-2, rtol=3e-2), \
        "mismatch vs reference"

    print("KERNEL_OK")
</pallas_src>

<mosaic_0001>
module attributes {stable_mosaic.version = 11 : i64} {
  func.func @_fused_stack_kernel(%arg0: i32, %arg1: i32, %arg2: memref<2x4x16xf32, #tpu.memory_space<vmem>>, %arg3: memref<8x4xbf16, #tpu.memory_space<vmem>>, %arg4: memref<8x1xf32, #tpu.memory_space<vmem>>, %arg5: memref<16x8xbf16, #tpu.memory_space<vmem>>, %arg6: memref<16x1xf32, #tpu.memory_space<vmem>>, %arg7: memref<2x16x16xbf16, #tpu.memory_space<vmem>>) attributes {dimension_semantics = [#tpu.dimension_semantics<parallel>, #tpu.dimension_semantics<parallel>], iteration_bounds = array<i64: 1, 1>, scalar_prefetch = 0 : i64, scratch_operands = 0 : i64, tpu.core_type = #tpu.core_type<tc>, window_params = [{transform_indices = @transform_0, window_bounds = array<i64: 2, 4, 16>}, {pipeline_mode = #tpu.pipeline_mode<synchronous>, transform_indices = @transform_1, window_bounds = array<i64: 8, 4>}, {pipeline_mode = #tpu.pipeline_mode<synchronous>, transform_indices = @transform_2, window_bounds = array<i64: 8, 1>}, {pipeline_mode = #tpu.pipeline_mode<synchronous>, transform_indices = @transform_3, window_bounds = array<i64: 16, 8>}, {pipeline_mode = #tpu.pipeline_mode<synchronous>, transform_indices = @transform_4, window_bounds = array<i64: 16, 1>}, {transform_indices = @transform_5, window_bounds = array<i64: 2, 16, 16>}]} {
    %c0 = arith.constant 0 : index
    %c0_0 = arith.constant 0 : index
    %c0_1 = arith.constant 0 : index
    %0 = vector.load %arg2[%c0, %c0_0, %c0_1] : memref<2x4x16xf32, #tpu.memory_space<vmem>>, vector<1x4x16xf32>
    %1 = vector.shape_cast %0 : vector<1x4x16xf32> to vector<4x16xf32>
    %c0_2 = arith.constant 0 : index
    %c0_3 = arith.constant 0 : index
    %2 = vector.load %arg3[%c0_2, %c0_3] : memref<8x4xbf16, #tpu.memory_space<vmem>>, vector<8x4xbf16>
    %c0_4 = arith.constant 0 : index
    %c0_5 = arith.constant 0 : index
    %3 = vector.load %arg4[%c0_4, %c0_5] : memref<8x1xf32, #tpu.memory_space<vmem>>, vector<8x1xf32>
    %4 = arith.truncf %1 : vector<4x16xf32> to vector<4x16xbf16>
    %cst = arith.constant dense<0.000000e+00> : vector<8x16xf32>
    %5 = tpu.matmul %2, %4, %cst {dimension_numbers = #tpu.dot_dimension_numbers<[1], [0], [0], [1], [0, 0, 1, 1], [], []>} : vector<8x4xbf16>, vector<4x16xbf16>, vector<8x16xf32> -> vector<8x16xf32>
    %6 = vector.broadcast %3 : vector<8x1xf32> to vector<8x16xf32>
    %7 = arith.addf %5, %6 : vector<8x16xf32>
    %cst_6 = arith.constant 0.000000e+00 : f32
    %8 = vector.broadcast %cst_6 : f32 to vector<8x16xf32>
    %9 = arith.maximumf %7, %8 : vector<8x16xf32>
    %c0_7 = arith.constant 0 : index
    %c0_8 = arith.constant 0 : index
    %10 = vector.load %arg5[%c0_7, %c0_8] : memref<16x8xbf16, #tpu.memory_space<vmem>>, vector<16x8xbf16>
    %c0_9 = arith.constant 0 : index
    %c0_10 = arith.constant 0 : index
    %11 = vector.load %arg6[%c0_9, %c0_10] : memref<16x1xf32, #tpu.memory_space<vmem>>, vector<16x1xf32>
    %12 = arith.truncf %9 : vector<8x16xf32> to vector<8x16xbf16>
    %cst_11 = arith.constant dense<0.000000e+00> : vector<16x16xf32>
    %13 = tpu.matmul %10, %12, %cst_11 {dimension_numbers = #tpu.dot_dimension_numbers<[1], [0], [0], [1], [0, 0, 1, 1], [], []>} : vector<16x8xbf16>, vector<8x16xbf16>, vector<16x16xf32> -> vector<16x16xf32>
    %14 = vector.broadcast %11 : vector<16x1xf32> to vector<16x16xf32>
    %15 = arith.addf %13, %14 : vector<16x16xf32>
    %cst_12 = arith.constant 0.000000e+00 : f32
    %16 = vector.broadcast %cst_12 : f32 to vector<16x16xf32>
    %17 = arith.maximumf %15, %16 : vector<16x16xf32>
    %18 = arith.truncf %17 : vector<16x16xf32> to vector<16x16xbf16>
    %c0_13 = arith.constant 0 : index
    %c0_14 = arith.constant 0 : index
    %c0_15 = arith.constant 0 : index
    %19 = vector.load %arg7[%c0_13, %c0_14, %c0_15] : memref<2x16x16xbf16, #tpu.memory_space<vmem>>, vector<1x16x16xbf16>
    %20 = vector.shape_cast %19 : vector<1x16x16xbf16> to vector<16x16xbf16>
    %21 = vector.shape_cast %18 : vector<16x16xbf16> to vector<1x16x16xbf16>
    tpu.vector_store %arg7[%c0_13, %c0_14, %c0_15], %21 {strides = array<i32>} : memref<2x16x16xbf16, #tpu.memory_space<vmem>>, vector<1x16x16xbf16>,
    %c1 = arith.constant 1 : index
    %c0_16 = arith.constant 0 : index
    %c0_17 = arith.constant 0 : index
    %22 = vector.load %arg2[%c1, %c0_16, %c0_17] : memref<2x4x16xf32, #tpu.memory_space<vmem>>, vector<1x4x16xf32>
    %23 = vector.shape_cast %22 : vector<1x4x16xf32> to vector<4x16xf32>
    %c0_18 = arith.constant 0 : index
    %c0_19 = arith.constant 0 : index
    %24 = vector.load %arg3[%c0_18, %c0_19] : memref<8x4xbf16, #tpu.memory_space<vmem>>, vector<8x4xbf16>
    %c0_20 = arith.constant 0 : index
    %c0_21 = arith.constant 0 : index
    %25 = vector.load %arg4[%c0_20, %c0_21] : memref<8x1xf32, #tpu.memory_space<vmem>>, vector<8x1xf32>
    %26 = arith.truncf %23 : vector<4x16xf32> to vector<4x16xbf16>
    %cst_22 = arith.constant dense<0.000000e+00> : vector<8x16xf32>
    %27 = tpu.matmul %24, %26, %cst_22 {dimension_numbers = #tpu.dot_dimension_numbers<[1], [0], [0], [1], [0, 0, 1, 1], [], []>} : vector<8x4xbf16>, vector<4x16xbf16>, vector<8x16xf32> -> vector<8x16xf32>
    %28 = vector.broadcast %25 : vector<8x1xf32> to vector<8x16xf32>
    %29 = arith.addf %27, %28 : vector<8x16xf32>
    %cst_23 = arith.constant 0.000000e+00 : f32
    %30 = vector.broadcast %cst_23 : f32 to vector<8x16xf32>
    %31 = arith.maximumf %29, %30 : vector<8x16xf32>
    %c0_24 = arith.constant 0 : index
    %c0_25 = arith.constant 0 : index
    %32 = vector.load %arg5[%c0_24, %c0_25] : memref<16x8xbf16, #tpu.memory_space<vmem>>, vector<16x8xbf16>
    %c0_26 = arith.constant 0 : index
    %c0_27 = arith.constant 0 : index
    %33 = vector.load %arg6[%c0_26, %c0_27] : memref<16x1xf32, #tpu.memory_space<vmem>>, vector<16x1xf32>
    %34 = arith.truncf %31 : vector<8x16xf32> to vector<8x16xbf16>
    %cst_28 = arith.constant dense<0.000000e+00> : vector<16x16xf32>
    %35 = tpu.matmul %32, %34, %cst_28 {dimension_numbers = #tpu.dot_dimension_numbers<[1], [0], [0], [1], [0, 0, 1, 1], [], []>} : vector<16x8xbf16>, vector<8x16xbf16>, vector<16x16xf32> -> vector<16x16xf32>
    %36 = vector.broadcast %33 : vector<16x1xf32> to vector<16x16xf32>
    %37 = arith.addf %35, %36 : vector<16x16xf32>
    %cst_29 = arith.constant 0.000000e+00 : f32
    %38 = vector.broadcast %cst_29 : f32 to vector<16x16xf32>
    %39 = arith.maximumf %37, %38 : vector<16x16xf32>
    %40 = arith.truncf %39 : vector<16x16xf32> to vector<16x16xbf16>
    %c1_30 = arith.constant 1 : index
    %c0_31 = arith.constant 0 : index
    %c0_32 = arith.constant 0 : index
    %41 = vector.load %arg7[%c1_30, %c0_31, %c0_32] : memref<2x16x16xbf16, #tpu.memory_space<vmem>>, vector<1x16x16xbf16>
    %42 = vector.shape_cast %41 : vector<1x16x16xbf16> to vector<16x16xbf16>
    %43 = vector.shape_cast %40 : vector<16x16xbf16> to vector<1x16x16xbf16>
    tpu.vector_store %arg7[%c1_30, %c0_31, %c0_32], %43 {strides = array<i32>} : memref<2x16x16xbf16, #tpu.memory_space<vmem>>, vector<1x16x16xbf16>,
    return
  }
  func.func @transform_0(%arg0: i32, %arg1: i32) -> (i32, i32, i32) {
    %c0_i32 = arith.constant 0 : i32
    %c0_i32_0 = arith.constant 0 : i32
    return %arg0, %c0_i32, %arg1 : i32, i32, i32
  }
  func.func @transform_1(%arg0: i32, %arg1: i32) -> (i32, i32) {
    %c0_i32 = arith.constant 0 : i32
    %c0_i32_0 = arith.constant 0 : i32
    %c0_i32_1 = arith.constant 0 : i32
    return %c0_i32, %c0_i32_0 : i32, i32
  }
  func.func @transform_2(%arg0: i32, %arg1: i32) -> (i32, i32) {
    %c0_i32 = arith.constant 0 : i32
    %c0_i32_0 = arith.constant 0 : i32
    %c0_i32_1 = arith.constant 0 : i32
    return %c0_i32, %c0_i32_0 : i32, i32
  }
  func.func @transform_3(%arg0: i32, %arg1: i32) -> (i32, i32) {
    %c0_i32 = arith.constant 0 : i32
    %c0_i32_0 = arith.constant 0 : i32
    %c0_i32_1 = arith.constant 0 : i32
    return %c0_i32, %c0_i32_0 : i32, i32
  }
  func.func @transform_4(%arg0: i32, %arg1: i32) -> (i32, i32) {
    %c0_i32 = arith.constant 0 : i32
    %c0_i32_0 = arith.constant 0 : i32
    %c0_i32_1 = arith.constant 0 : i32
    return %c0_i32, %c0_i32_0 : i32, i32
  }
  func.func @transform_5(%arg0: i32, %arg1: i32) -> (i32, i32, i32) {
    %c0_i32 = arith.constant 0 : i32
    %c0_i32_0 = arith.constant 0 : i32
    return %arg0, %c0_i32, %arg1 : i32, i32, i32
  }
}

</mosaic_0001>

<llo_original>
// kernel: crossover_block_forward.1
$region0: #{crossover_block_forward.1}
  #allocation0 [shape = 'u32[]', space=smem, size = 0x4, offset = 0x4, fixed_abs, tag = 'smem constant byte address 0x4 - core index']
  #allocation1 [shape = 'u32[72,128]{1,0:T(1,128)}', space=vmem, size = 0x9000, scoped, tag = 'internal scratch']
  %s0 = inlined_call_operand.vmem [shape: f32[2,4,16], index: 0, kind: input, shape index: {}]
  %s1 = inlined_call_operand.vmem [shape: bf16[8,4], index: 1, kind: input, shape index: {}]
  %s2 = inlined_call_operand.vmem [shape: f32[8,1], index: 2, kind: input, shape index: {}]
  %s3 = inlined_call_operand.vmem [shape: bf16[16,8], index: 3, kind: input, shape index: {}]
  %s4 = inlined_call_operand.vmem [shape: f32[16,1], index: 4, kind: input, shape index: {}]
  %s5 = inlined_call_operand.hbm [shape: bf16[2,16,16], index: 5, kind: output, shape index: {}]
  %s6 = sld [smem:[#allocation0]]
  $region30: #{crossover_block_forward.1} parent=0
    _
  %s8 = ssub.s32 1, %s6
  %s9 = scalar_select 0, %s8, %s6
  $region1: #{crossover_block_forward.1} parent=0
    #allocation2 [shape = 'u8[8192]{0}', space=vmem, size = 0x2000, scoped, tag = 'output window, operand 0, single buffered']
    #allocation3 [shape = 's32[1]{0}', space=sflag, size = 0x4, scoped, tag = 'scoped memory for crossover_block_forward.1']
    %10 = vsyncpa [#allocation3], 0
    // Predicated region
    $region2: #{crossover_block_forward.1} parent=1 // pred_check
      _
    $region3: #{crossover_block_forward.1} parent=1 // pred_check_branch
      %12 = sbr.rel (0) target = $region5
    $region4: #{crossover_block_forward.1} parent=1 // pred_region
      _
    $region5: #{crossover_block_forward.1} parent=1 // pred_fallthru
      _
    // Predicated region
    $region6: #{crossover_block_forward.1} parent=1 // pred_check
      _
    $region7: #{crossover_block_forward.1} parent=1 // pred_check_branch
      %14 = sbr.rel (0) target = $region9
    $region8: #{crossover_block_forward.1} parent=1 // pred_region
      _
    $region9: #{crossover_block_forward.1} parent=1 // pred_fallthru
      _
    // Predicated region
    $region10: #{crossover_block_forward.1} parent=1 // pred_check
      _
    $region11: #{crossover_block_forward.1} parent=1 // pred_check_branch
      %16 = sbr.rel (0) target = $region13
    $region12: #{crossover_block_forward.1} parent=1 // pred_region
      _
    $region13: #{crossover_block_forward.1} parent=1 // pred_fallthru
      _
    // Predicated region
    $region14: #{crossover_block_forward.1} parent=1 // pred_check
      _
    $region15: #{crossover_block_forward.1} parent=1 // pred_check_branch
      %18 = sbr.rel (0) target = $region17
    $region16: #{crossover_block_forward.1} parent=1 // pred_region
      _
    $region17: #{crossover_block_forward.1} parent=1 // pred_fallthru
      _
    // Predicated region
    $region18: #{crossover_block_forward.1} parent=1 // pred_check
      _
    $region19: #{crossover_block_forward.1} parent=1 // pred_check_branch
      %20 = sbr.rel (0) target = $region21
    $region20: #{crossover_block_forward.1} parent=1 // pred_region
      _
    $region21: #{crossover_block_forward.1} parent=1 // pred_fallthru
      _
    %v22 = vld [vmem:[%s0] sm:$0xf]
    %v23 = vld [vmem:[%s1] sm:$0xf]
    %v24 = vld [vmem:[%s2] sm:$0xff]
    %v25 = vpack.c.bf16 %v22, %v22
    %27 = vset.pattern.permute.xlu0 0
    %28 = vperm.xlu0 %27, %v24
    %v29 = vpop.permute.xlu0 %28
    %vm31 = vcmask 31744
    %v33 = vsel %vm31, %v23, 0
    %vm35 = vcmask 1041408
    %v37 = vsel %vm35, %v25, 0
    %39 = vmatpush.bf16.msra.mxu0 0
    %40 = vmatpush.bf16.msra.mxu0 0
    %41 = vmatpush.bf16.msra.mxu0 0
    %42 = vmatpush.bf16.msra.mxu0 0
    %43 = vmatpush.bf16.msra.mxu0 0
    %44 = vmatpush.bf16.msra.mxu0 0
    %45 = vmatpush.bf16.msra.mxu0 0
    %46 = vmatpush.bf16.msra.mxu0 %v37
    %47 = vmatmul.bf16.gmra.mxu0 %v33
    %v48 = vpop.f32.mrf.mxu0
    %v49 = vadd.f32 %v29, %v48
    %v50 = vpop.f32.mrf.mxu0
    %51 = vdwg.mxu0
    %v52 = vmax.f32 %v49, 0.0
    %v53 = vld [vmem:[%s3] sm:$0xf]
    %v54 = vld [vmem:[%s3 + $0x4] sm:$0xf]
    %v55 = vld [vmem:[%s4] sm:$0xff]
    %v56 = vld [vmem:[%s4 + $0x8] sm:$0xff]
    %v57 = vpack.c.bf16 %v52, %v52
    %59 = vset.pattern.permute.xlu0 0
    %60 = vperm.xlu0 %59, %v55
    %v61 = vpop.permute.xlu0 %60
    %64 = vset.pattern.permute.xlu0 0
    %65 = vperm.xlu0 %64, %v56
    %v66 = vpop.permute.xlu0 %65
    %v70 = vunpack.c.l.b16 %v53
    %v71 = vunpack.c.l.b16 %v54
    %v72 = vpack.c.b16 %v71, %v70
    %vm73 = vcmask 64512
    %v75 = vsel %vm73, %v72, 0
    %vm77 = vcmask 1043456
    %v79 = vsel %vm77, %v57, 0
    %81 = vmatpush.bf16.msra.mxu0 0
    %82 = vmatpush.bf16.msra.mxu0 0
    %83 = vmatpush.bf16.msra.mxu0 0
    %84 = vmatpush.bf16.msra.mxu0 0
    %85 = vmatpush.bf16.msra.mxu0 0
    %86 = vmatpush.bf16.msra.mxu0 0
    %87 = vmatpush.bf16.msra.mxu0 0
    %88 = vmatpush.bf16.msra.mxu0 %v79
    %89 = vmatmul.bf16.gmra.mxu0 %v75
    %v90 = vpop.f32.mrf.mxu0
    %v91 = vadd.f32 %v61, %v90
    %v92 = vpop.f32.mrf.mxu0
    %v93 = vadd.f32 %v66, %v92
    %94 = vdwg.mxu0
    %v95 = vmax.f32 %v91, 0.0
    %v96 = vmax.f32 %v93, 0.0
    %v97 = vpack.c.bf16 %v95, %v95
    %v98 = vpack.c.bf16 %v96, %v96
    %vm99 = vcmask 125952
    %100 = vst.msk [vmem:[#allocation2] sm:$0xf] %vm99, %v97
    %101 = vst.msk [vmem:[#allocation2 + $0x4] sm:$0xf] %vm99, %v98
    %s102 = scalar_lea.vmem %s0, 4
    %v103 = vld [vmem:[%s102] sm:$0xf]
    %v104 = vld [vmem:[%s1] sm:$0xf]
    %v105 = vld [vmem:[%s2] sm:$0xff]
    %v106 = vpack.c.bf16 %v103, %v103
    %108 = vset.pattern.permute.xlu0 0
    %109 = vperm.xlu0 %108, %v105
    %v110 = vpop.permute.xlu0 %109
    %v113 = vsel %vm31, %v104, 0
    %v116 = vsel %vm35, %v106, 0
    %118 = vmatpush.bf16.msra.mxu0 0
    %119 = vmatpush.bf16.msra.mxu0 0
    %120 = vmatpush.bf16.msra.mxu0 0
    %121 = vmatpush.bf16.msra.mxu0 0
    %122 = vmatpush.bf16.msra.mxu0 0
    %123 = vmatpush.bf16.msra.mxu0 0
    %124 = vmatpush.bf16.msra.mxu0 0
    %125 = vmatpush.bf16.msra.mxu0 %v116
    %126 = vmatmul.bf16.gmra.mxu0 %v113
    %v127 = vpop.f32.mrf.mxu0
    %v128 = vadd.f32 %v110, %v127
    %v129 = vpop.f32.mrf.mxu0
    %130 = vdwg.mxu0
    %v131 = vmax.f32 %v128, 0.0
    %v132 = vld [vmem:[%s3] sm:$0xf]
    %v133 = vld [vmem:[%s3 + $0x4] sm:$0xf]
    %v134 = vld [vmem:[%s4] sm:$0xff]
    %v135 = vld [vmem:[%s4 + $0x8] sm:$0xff]
    %v136 = vpack.c.bf16 %v131, %v131
    %138 = vset.pattern.permute.xlu0 0
    %139 = vperm.xlu0 %138, %v134
    %v140 = vpop.permute.xlu0 %139
    %143 = vset.pattern.permute.xlu0 0
    %144 = vperm.xlu0 %143, %v135
    %v145 = vpop.permute.xlu0 %144
    %v149 = vunpack.c.l.b16 %v132
    %v150 = vunpack.c.l.b16 %v133
    %v151 = vpack.c.b16 %v150, %v149
    %v153 = vsel %vm73, %v151, 0
    %v156 = vsel %vm77, %v136, 0
    %158 = vmatpush.bf16.msra.mxu0 0
    %159 = vmatpush.bf16.msra.mxu0 0
    %160 = vmatpush.bf16.msra.mxu0 0
    %161 = vmatpush.bf16.msra.mxu0 0
    %162 = vmatpush.bf16.msra.mxu0 0
    %163 = vmatpush.bf16.msra.mxu0 0
    %164 = vmatpush.bf16.msra.mxu0 0
    %165 = vmatpush.bf16.msra.mxu0 %v156
    %166 = vmatmul.bf16.gmra.mxu0 %v153
    %v167 = vpop.f32.mrf.mxu0
    %v168 = vadd.f32 %v140, %v167
    %v169 = vpop.f32.mrf.mxu0
    %v170 = vadd.f32 %v145, %v169
    %171 = vdwg.mxu0
    %v172 = vmax.f32 %v168, 0.0
    %v173 = vmax.f32 %v170, 0.0
    %v174 = vpack.c.bf16 %v172, %v172
    %v175 = vpack.c.bf16 %v173, %v173
    %s176 = scalar_lea.vmem [#allocation2], 8
    %177 = vst.msk [vmem:[%s176] sm:$0xf] %vm99, %v174
    %178 = vst.msk [vmem:[%s176 + $0x4] sm:$0xf] %vm99, %v175
    // Predicated region
    $region22: #{crossover_block_forward.1} parent=1 // pred_check
      _
    $region23: #{crossover_block_forward.1} parent=1 // pred_check_branch
      %180 = sbr.rel (0) target = $region25
    $region24: #{crossover_block_forward.1} parent=1 // pred_region
      %182 = vsyncadd [#allocation3], 0
      %s183 = sshll.u32 [#allocation2], 4
      %s184 = int_to_ptr.vmem [resolvable:$true] %s183
      %s185 = sshll.u32 %s5, 4
      %s186 = int_to_ptr.hbm [resolvable:$true] %s185
      %191 = dma.vmem_to_hbm [thread:$0]  %s184, 256, %s186, [#allocation3], 64, 64, 4
    $region25: #{crossover_block_forward.1} parent=1 // pred_fallthru
      _
    // Predicated region
    $region26: #{crossover_block_forward.1} parent=1 // pred_check
      _
    $region27: #{crossover_block_forward.1} parent=1 // pred_check_branch
      %193 = sbr.rel (0) target = $region29
    $region28: #{crossover_block_forward.1} parent=1 // pred_region
      %195 = dma.done [#allocation3], 256
    $region29: #{crossover_block_forward.1} parent=1 // pred_fallthru
      _
    %196 = vsyncpa [#allocation3], 1

</llo_original>
